<compile_context>
chip_gen: v6e
topology: v6e:2x2x1
jax: 0.10.0
libtpu: 0.0.40
codegen_flags: <defaults>
</compile_context>

<pallas_src>
import jax
import jax.numpy as jnp
from jax.experimental import pallas as pl
from jax.experimental.pallas import tpu as pltpu


def tower_kernel(x_ref, w1_ref, b1_ref, w2_ref, b2_ref, o_ref):
    # fc1: (TB, in) @ (in, hid) on the MXU; bf16 operands, f32 accumulation.
    x = x_ref[...].astype(jnp.bfloat16)
    h = jnp.dot(x, w1_ref[...], preferred_element_type=jnp.float32)
    h = jnp.maximum(h + b1_ref[...], 0.0)                 # bias + ReLU in f32 (VPU)
    # fc2: (TB, hid) @ (hid, out); bf16 operands, f32 accumulation.
    z = jnp.dot(h.astype(jnp.bfloat16), w2_ref[...],
                preferred_element_type=jnp.float32)
    z = z + b2_ref[...]
    # Sigmoid (module's `softmax` attr is nn.Sigmoid) via tanh: single EUP op,
    # exact (no approx reciprocal).
    o_ref[...] = (0.5 * jnp.tanh(0.5 * z) + 0.5).astype(o_ref.dtype)


def tower_forward(x, w1, b1, w2, b2, *, tb_max=8192):
    """x: (B, in); w1: (in, hid); b1: (hid,) or (1, hid); w2: (hid, out); b2: (out,) or (1, out).

    Returns sigmoid(relu(x @ w1 + b1) @ w2 + b2) as float32 of shape (B, out).
    """
    B, in_size = x.shape
    hid = w1.shape[1]
    out_size = w2.shape[1]

    # One-time, tiny parameter prep (weights are KiB-scale): bf16 for the MXU,
    # f32 biases for the epilogue, biases normalized to (1, dim).
    w1b = jnp.asarray(w1, jnp.float32).astype(jnp.bfloat16)
    w2b = jnp.asarray(w2, jnp.float32).astype(jnp.bfloat16)
    b1r = jnp.asarray(b1, jnp.float32).reshape(1, hid)
    b2r = jnp.asarray(b2, jnp.float32).reshape(1, out_size)

    # Batch tile: as large as possible (step overhead ~0.35us dominates at
    # small tiles), capped by tb_max.  If more than one block is needed the
    # tile must be a sublane multiple (8); a single block may equal B exactly.
    tb = min(tb_max, B)
    if tb < B:
        tb = max(8, (tb // 8) * 8)
    grid_b = pl.cdiv(B, tb)

    cost = pl.CostEstimate(
        flops=2 * B * (in_size * hid + hid * out_size),
        transcendentals=B * out_size,
        bytes_accessed=B * 4 * (in_size + out_size)
        + 2 * (in_size * hid + hid * out_size) + 4 * (hid + out_size),
    )

    return pl.pallas_call(
        tower_kernel,
        out_shape=jax.ShapeDtypeStruct((B, out_size), jnp.float32),
        grid=(grid_b,),
        in_specs=[
            pl.BlockSpec((tb, in_size), lambda i: (i, 0)),     # x batch tile (streamed)
            pl.BlockSpec((in_size, hid), lambda i: (0, 0)),    # W1 resident
            pl.BlockSpec((1, hid), lambda i: (0, 0)),          # b1 resident
            pl.BlockSpec((hid, out_size), lambda i: (0, 0)),   # W2 resident
            pl.BlockSpec((1, out_size), lambda i: (0, 0)),     # b2 resident
        ],
        out_specs=pl.BlockSpec((tb, out_size), lambda i: (i, 0)),
        compiler_params=pltpu.CompilerParams(
            dimension_semantics=("parallel",)),
        cost_estimate=cost,
    )(x, w1b, b1r, w2b, b2r)


def reference_forward(x, w1, b1, w2, b2):
    h = jnp.maximum(x @ w1 + b1.reshape(1, -1), 0.0)
    return jax.nn.sigmoid(h @ w2 + b2.reshape(1, -1))


if __name__ == "__main__":
    # Shapes consistent with Tower(input_size, output_size, hidden_size).
    batch, input_size, hidden_size, output_size = 8, 32, 16, 4

    key = jax.random.PRNGKey(0)
    k1, k2, k3, k4, kx, kb = jax.random.split(key, 6)

    # Deterministic synthetic parameters (not a checkpoint load).
    w1 = jax.random.normal(k1, (input_size, hidden_size), jnp.float32) * 0.1
    b1 = jax.random.normal(k2, (1, hidden_size), jnp.float32) * 0.1
    w2 = jax.random.normal(k3, (hidden_size, output_size), jnp.float32) * 0.1
    b2 = jax.random.normal(k4, (1, output_size), jnp.float32) * 0.1

    # Small-batch path: single block equal to the (non-multiple-of-128) batch.
    x = jax.random.normal(kx, (batch, input_size), jnp.float32)
    y = jax.block_until_ready(tower_forward(x, w1, b1, w2, b2))
    y_ref = reference_forward(x, w1, b1, w2, b2)
    assert y.shape == (batch, output_size)
    # bf16 MXU operands -> loosened tolerance vs f32 reference.
    assert jnp.allclose(y, y_ref, atol=2e-2, rtol=2e-2)

    # Multi-block pipelined path with a ragged last block (grid > 1).
    xb = jax.random.normal(kb, (1000, input_size), jnp.float32)
    yb = jax.block_until_ready(tower_forward(xb, w1, b1, w2, b2, tb_max=256))
    yb_ref = reference_forward(xb, w1, b1, w2, b2)
    assert yb.shape == (1000, output_size)
    assert jnp.allclose(yb, yb_ref, atol=2e-2, rtol=2e-2)

    print("KERNEL_OK")
</pallas_src>

<mosaic_0001>
module attributes {stable_mosaic.version = 11 : i64} {
  func.func @tower_kernel(%arg0: i32, %arg1: memref<8x32xf32, #tpu.memory_space<vmem>>, %arg2: memref<32x16xbf16, #tpu.memory_space<vmem>>, %arg3: memref<1x16xf32, #tpu.memory_space<vmem>>, %arg4: memref<16x4xbf16, #tpu.memory_space<vmem>>, %arg5: memref<1x4xf32, #tpu.memory_space<vmem>>, %arg6: memref<8x4xf32, #tpu.memory_space<vmem>>) attributes {dimension_semantics = [#tpu.dimension_semantics<parallel>], iteration_bounds = array<i64: 1>, scalar_prefetch = 0 : i64, scratch_operands = 0 : i64, tpu.core_type = #tpu.core_type<tc>, window_params = [{transform_indices = @transform_0, window_bounds = array<i64: 8, 32>}, {pipeline_mode = #tpu.pipeline_mode<synchronous>, transform_indices = @transform_1, window_bounds = array<i64: 32, 16>}, {pipeline_mode = #tpu.pipeline_mode<synchronous>, transform_indices = @transform_2, window_bounds = array<i64: 1, 16>}, {pipeline_mode = #tpu.pipeline_mode<synchronous>, transform_indices = @transform_3, window_bounds = array<i64: 16, 4>}, {pipeline_mode = #tpu.pipeline_mode<synchronous>, transform_indices = @transform_4, window_bounds = array<i64: 1, 4>}, {transform_indices = @transform_5, window_bounds = array<i64: 8, 4>}]} {
    %c0 = arith.constant 0 : index
    %c0_0 = arith.constant 0 : index
    %0 = vector.load %arg1[%c0, %c0_0] : memref<8x32xf32, #tpu.memory_space<vmem>>, vector<8x32xf32>
    %1 = arith.truncf %0 : vector<8x32xf32> to vector<8x32xbf16>
    %c0_1 = arith.constant 0 : index
    %c0_2 = arith.constant 0 : index
    %2 = vector.load %arg2[%c0_1, %c0_2] : memref<32x16xbf16, #tpu.memory_space<vmem>>, vector<32x16xbf16>
    %cst = arith.constant dense<0.000000e+00> : vector<8x16xf32>
    %3 = tpu.matmul %1, %2, %cst {dimension_numbers = #tpu.dot_dimension_numbers<[1], [0], [0], [1], [0, 0, 1, 1], [], []>} : vector<8x32xbf16>, vector<32x16xbf16>, vector<8x16xf32> -> vector<8x16xf32>
    %c0_3 = arith.constant 0 : index
    %c0_4 = arith.constant 0 : index
    %4 = vector.load %arg3[%c0_3, %c0_4] : memref<1x16xf32, #tpu.memory_space<vmem>>, vector<1x16xf32>
    %5 = vector.broadcast %4 : vector<1x16xf32> to vector<8x16xf32>
    %6 = arith.addf %3, %5 : vector<8x16xf32>
    %cst_5 = arith.constant 0.000000e+00 : f32
    %7 = vector.broadcast %cst_5 : f32 to vector<8x16xf32>
    %8 = arith.maximumf %6, %7 : vector<8x16xf32>
    %9 = arith.truncf %8 : vector<8x16xf32> to vector<8x16xbf16>
    %c0_6 = arith.constant 0 : index
    %c0_7 = arith.constant 0 : index
    %10 = vector.load %arg4[%c0_6, %c0_7] : memref<16x4xbf16, #tpu.memory_space<vmem>>, vector<16x4xbf16>
    %cst_8 = arith.constant dense<0.000000e+00> : vector<8x4xf32>
    %11 = tpu.matmul %9, %10, %cst_8 {dimension_numbers = #tpu.dot_dimension_numbers<[1], [0], [0], [1], [0, 0, 1, 1], [], []>} : vector<8x16xbf16>, vector<16x4xbf16>, vector<8x4xf32> -> vector<8x4xf32>
    %c0_9 = arith.constant 0 : index
    %c0_10 = arith.constant 0 : index
    %12 = vector.load %arg5[%c0_9, %c0_10] : memref<1x4xf32, #tpu.memory_space<vmem>>, vector<1x4xf32>
    %13 = vector.broadcast %12 : vector<1x4xf32> to vector<8x4xf32>
    %14 = arith.addf %11, %13 : vector<8x4xf32>
    %cst_11 = arith.constant 5.000000e-01 : f32
    %15 = vector.broadcast %cst_11 : f32 to vector<8x4xf32>
    %16 = arith.mulf %15, %14 : vector<8x4xf32>
    %17 = math.tanh %16 : vector<8x4xf32>
    %cst_12 = arith.constant 5.000000e-01 : f32
    %18 = vector.broadcast %cst_12 : f32 to vector<8x4xf32>
    %19 = arith.mulf %18, %17 : vector<8x4xf32>
    %cst_13 = arith.constant 5.000000e-01 : f32
    %20 = vector.broadcast %cst_13 : f32 to vector<8x4xf32>
    %21 = arith.addf %19, %20 : vector<8x4xf32>
    %c0_14 = arith.constant 0 : index
    %c0_15 = arith.constant 0 : index
    %22 = vector.load %arg6[%c0_14, %c0_15] : memref<8x4xf32, #tpu.memory_space<vmem>>, vector<8x4xf32>
    tpu.vector_store %arg6[%c0_14, %c0_15], %21 {strides = array<i32>} : memref<8x4xf32, #tpu.memory_space<vmem>>, vector<8x4xf32>,
    return
  }
  func.func @transform_0(%arg0: i32) -> (i32, i32) {
    %c0_i32 = arith.constant 0 : i32
    %c0_i32_0 = arith.constant 0 : i32
    return %arg0, %c0_i32 : i32, i32
  }
  func.func @transform_1(%arg0: i32) -> (i32, i32) {
    %c0_i32 = arith.constant 0 : i32
    %c0_i32_0 = arith.constant 0 : i32
    %c0_i32_1 = arith.constant 0 : i32
    return %c0_i32, %c0_i32_0 : i32, i32
  }
  func.func @transform_2(%arg0: i32) -> (i32, i32) {
    %c0_i32 = arith.constant 0 : i32
    %c0_i32_0 = arith.constant 0 : i32
    %c0_i32_1 = arith.constant 0 : i32
    return %c0_i32, %c0_i32_0 : i32, i32
  }
  func.func @transform_3(%arg0: i32) -> (i32, i32) {
    %c0_i32 = arith.constant 0 : i32
    %c0_i32_0 = arith.constant 0 : i32
    %c0_i32_1 = arith.constant 0 : i32
    return %c0_i32, %c0_i32_0 : i32, i32
  }
  func.func @transform_4(%arg0: i32) -> (i32, i32) {
    %c0_i32 = arith.constant 0 : i32
    %c0_i32_0 = arith.constant 0 : i32
    %c0_i32_1 = arith.constant 0 : i32
    return %c0_i32, %c0_i32_0 : i32, i32
  }
  func.func @transform_5(%arg0: i32) -> (i32, i32) {
    %c0_i32 = arith.constant 0 : i32
    %c0_i32_0 = arith.constant 0 : i32
    return %arg0, %c0_i32 : i32, i32
  }
}

</mosaic_0001>

<llo_original>
// kernel: tpu_custom_call.1
$region0: #{tpu_custom_call.1}
  #allocation0 [shape = 'u32[]', space=smem, size = 0x4, offset = 0x4, fixed_abs, tag = 'smem constant byte address 0x4 - core index']
  #allocation1 [shape = 'u32[144,128]{1,0:T(1,128)}', space=vmem, size = 0x12000, scoped, tag = 'internal scratch']
  %s0 = inlined_call_operand.vmem [shape: f32[8,32], index: 0, kind: input, shape index: {}]
  %s1 = inlined_call_operand.vmem [shape: bf16[32,16], index: 1, kind: input, shape index: {}]
  %s2 = inlined_call_operand.vmem [shape: f32[1,16], index: 2, kind: input, shape index: {}]
  %s3 = inlined_call_operand.vmem [shape: bf16[16,4], index: 3, kind: input, shape index: {}]
  %s4 = inlined_call_operand.vmem [shape: f32[1,4], index: 4, kind: input, shape index: {}]
  %s5 = inlined_call_operand.vmem [shape: f32[8,4], index: 5, kind: output, shape index: {}]
  %s6 = sld [smem:[#allocation0]]
  $region30: #{tpu_custom_call.1} parent=0
    _
  %s8 = ssub.s32 1, %s6
  %s9 = scalar_select 0, %s8, %s6
  // Predicated region
  $region2: #{tpu_custom_call.1} parent=0 // pred_check
    _
  $region3: #{tpu_custom_call.1} parent=0 // pred_check_branch
    %11 = sbr.rel (0) target = $region5
  $region4: #{tpu_custom_call.1} parent=0 // pred_region
    _
  $region5: #{tpu_custom_call.1} parent=0 // pred_fallthru
    _
  // Predicated region
  $region6: #{tpu_custom_call.1} parent=0 // pred_check
    _
  $region7: #{tpu_custom_call.1} parent=0 // pred_check_branch
    %13 = sbr.rel (0) target = $region9
  $region8: #{tpu_custom_call.1} parent=0 // pred_region
    _
  $region9: #{tpu_custom_call.1} parent=0 // pred_fallthru
    _
  // Predicated region
  $region10: #{tpu_custom_call.1} parent=0 // pred_check
    _
  $region11: #{tpu_custom_call.1} parent=0 // pred_check_branch
    %15 = sbr.rel (0) target = $region13
  $region12: #{tpu_custom_call.1} parent=0 // pred_region
    _
  $region13: #{tpu_custom_call.1} parent=0 // pred_fallthru
    _
  // Predicated region
  $region14: #{tpu_custom_call.1} parent=0 // pred_check
    _
  $region15: #{tpu_custom_call.1} parent=0 // pred_check_branch
    %17 = sbr.rel (0) target = $region17
  $region16: #{tpu_custom_call.1} parent=0 // pred_region
    _
  $region17: #{tpu_custom_call.1} parent=0 // pred_fallthru
    _
  // Predicated region
  $region18: #{tpu_custom_call.1} parent=0 // pred_check
    _
  $region19: #{tpu_custom_call.1} parent=0 // pred_check_branch
    %19 = sbr.rel (0) target = $region21
  $region20: #{tpu_custom_call.1} parent=0 // pred_region
    _
  $region21: #{tpu_custom_call.1} parent=0 // pred_fallthru
    _
  %v21 = vld [vmem:[%s0] sm:$0xff]
  %v22 = vpack.c.bf16 %v21, %v21
  %v23 = vld [vmem:[%s1] sm:$0xf]
  %v24 = vld [vmem:[%s1 + $0x4] sm:$0xf]
  %v25 = vld [vmem:[%s1 + $0x8] sm:$0xf]
  %v26 = vld [vmem:[%s1 + $0xc] sm:$0xf]
  %v27 = vld [vmem:[%s2] sm:$0x1]
  %v29 = vlaneseq
  %v30 = vshrl.u32 %v29, 7
  %v31 = vsub.s32 0, %v30
  %v32 = vrot.slane %v27, %v31
  %v38 = vunpack.c.l.b16 %v23
  %v39 = vunpack.c.l.b16 %v24
  %v40 = vunpack.c.l.b16 %v25
  %v41 = vunpack.c.l.b16 %v26
  %v42 = vpack.c.b16 %v39, %v38
  %v43 = vpack.c.b16 %v41, %v40
  %vm46 = vcmask 261120
  %v48 = vsel %vm46, %v22, 0
  %50 = vmatprep.subr.bf16.mxu0 0
  %51 = vmatpush1.bf16.msra.mxu0 0
  %52 = vmatprep.subr.bf16.mxu0 0
  %53 = vmatpush1.bf16.msra.mxu0 0
  %54 = vmatprep.subr.bf16.mxu0 0
  %55 = vmatpush1.bf16.msra.mxu0 0
  %56 = vmatprep.subr.bf16.mxu0 0
  %57 = vmatpush1.bf16.msra.mxu0 0
  %58 = vmatprep.subr.bf16.mxu0 0
  %59 = vmatpush1.bf16.msra.mxu0 0
  %60 = vmatprep.subr.bf16.mxu0 0
  %61 = vmatpush1.bf16.msra.mxu0 0
  %62 = vmatprep.subr.bf16.mxu0 0
  %63 = vmatpush1.bf16.msra.mxu0 %v43
  %64 = vmatprep.subr.bf16.mxu0 0
  %65 = vmatpush1.bf16.msra.mxu0 %v42
  %66 = vmatprep.subr.bf16.mxu0 0
  %67 = vmatpush2.bf16.msra.mxu0 0
  %68 = vmatprep.subr.bf16.mxu0 0
  %69 = vmatpush2.bf16.msra.mxu0 0
  %70 = vmatprep.subr.bf16.mxu0 0
  %71 = vmatpush2.bf16.msra.mxu0 0
  %72 = vmatprep.subr.bf16.mxu0 0
  %73 = vmatpush2.bf16.msra.mxu0 0
  %74 = vmatprep.subr.bf16.mxu0 0
  %75 = vmatpush2.bf16.msra.mxu0 0
  %76 = vmatprep.subr.bf16.mxu0 0
  %77 = vmatpush2.bf16.msra.mxu0 0
  %78 = vmatprep.subr.bf16.mxu0 0
  %79 = vmatpush2.bf16.msra.mxu0 0
  %80 = vmatprep.subr.bf16.mxu0 0
  %81 = vmatpush2.bf16.msra.mxu0 0
  %82 = vmatprep.mubr.bf16.mxu0 0
  %83 = vmatmul.mubr.bf16.gmra.mxu0 %v48
  %v84 = vpop.f32.mrf.mxu0
  %v85 = vadd.f32 %v32, %v84
  %v86 = vpop.f32.mrf.mxu0
  %v87 = vpop.f32.mrf.mxu0
  %v88 = vpop.f32.mrf.mxu0
  %89 = vdwg.mxu0
  %v90 = vmax.f32 %v85, 0.0
  %v91 = vpack.c.bf16 %v90, %v90
  %v92 = vld [vmem:[%s3] sm:$0xf]
  %v93 = vld [vmem:[%s3 + $0x4] sm:$0xf]
  %v94 = vld [vmem:[%s4] sm:$0x1]
  %v96 = vlaneseq
  %v97 = vshrl.u32 %v96, 7
  %v98 = vsub.s32 0, %v97
  %v99 = vrot.slane %v94, %v98
  %v103 = vunpack.c.l.b16 %v92
  %v104 = vunpack.c.l.b16 %v93
  %v105 = vpack.c.b16 %v104, %v103
  %vm107 = vcmask 130048
  %v109 = vsel %vm107, %v91, 0
  %111 = vmatprep.subr.bf16.mxu0 0
  %112 = vmatpush1.bf16.msra.mxu0 0
  %113 = vmatprep.subr.bf16.mxu0 0
  %114 = vmatpush1.bf16.msra.mxu0 0
  %115 = vmatprep.subr.bf16.mxu0 0
  %116 = vmatpush1.bf16.msra.mxu0 0
  %117 = vmatprep.subr.bf16.mxu0 0
  %118 = vmatpush1.bf16.msra.mxu0 0
  %119 = vmatprep.subr.bf16.mxu0 0
  %120 = vmatpush1.bf16.msra.mxu0 0
  %121 = vmatprep.subr.bf16.mxu0 0
  %122 = vmatpush1.bf16.msra.mxu0 0
  %123 = vmatprep.subr.bf16.mxu0 0
  %124 = vmatpush1.bf16.msra.mxu0 0
  %125 = vmatprep.subr.bf16.mxu0 0
  %126 = vmatpush1.bf16.msra.mxu0 %v105
  %127 = vmatprep.subr.bf16.mxu0 0
  %128 = vmatpush2.bf16.msra.mxu0 0
  %129 = vmatprep.subr.bf16.mxu0 0
  %130 = vmatpush2.bf16.msra.mxu0 0
  %131 = vmatprep.subr.bf16.mxu0 0
  %132 = vmatpush2.bf16.msra.mxu0 0
  %133 = vmatprep.subr.bf16.mxu0 0
  %134 = vmatpush2.bf16.msra.mxu0 0
  %135 = vmatprep.subr.bf16.mxu0 0
  %136 = vmatpush2.bf16.msra.mxu0 0
  %137 = vmatprep.subr.bf16.mxu0 0
  %138 = vmatpush2.bf16.msra.mxu0 0
  %139 = vmatprep.subr.bf16.mxu0 0
  %140 = vmatpush2.bf16.msra.mxu0 0
  %141 = vmatprep.subr.bf16.mxu0 0
  %142 = vmatpush2.bf16.msra.mxu0 0
  %143 = vmatprep.mubr.bf16.mxu0 0
  %144 = vmatmul.mubr.bf16.gmra.mxu0 %v109
  %v145 = vpop.f32.mrf.mxu0
  %v146 = vadd.f32 %v99, %v145
  %v147 = vpop.f32.mrf.mxu0
  %v148 = vpop.f32.mrf.mxu0
  %v149 = vpop.f32.mrf.mxu0
  %150 = vdwg.mxu0
  %v151 = vmul.f32 %v146, 0.5
  %v152 = vtanh.pop %v151
  %v153 = vmul.f32 %v152, 0.5
  %v154 = vadd.f32 %v153, 0.5
  %vm155 = vcmask 31744
  %156 = vst.msk [vmem:[%s5] sm:$0xff] %vm155, %v154
  // Predicated region
  $region22: #{tpu_custom_call.1} parent=0 // pred_check
    _
  $region23: #{tpu_custom_call.1} parent=0 // pred_check_branch
    %158 = sbr.rel (0) target = $region25
  $region24: #{tpu_custom_call.1} parent=0 // pred_region
    _
  $region25: #{tpu_custom_call.1} parent=0 // pred_fallthru
    _
  // Predicated region
  $region26: #{tpu_custom_call.1} parent=0 // pred_check
    _
  $region27: #{tpu_custom_call.1} parent=0 // pred_check_branch
    %160 = sbr.rel (0) target = $region29
  $region28: #{tpu_custom_call.1} parent=0 // pred_region
    _
  $region29: #{tpu_custom_call.1} parent=0 // pred_fallthru
    _

</llo_original>
